<compile_context>
chip_gen: v6e
topology: v6e:2x2x1
jax: 0.10.0
libtpu: 0.0.40
codegen_flags: <defaults>
</compile_context>

<pallas_src>
import math
import functools

import jax
import jax.numpy as jnp
from jax.experimental import pallas as pl
from jax.experimental.pallas import tpu as pltpu


def _round_up(v, m):
    return ((v + m - 1) // m) * m


def _tpu_config():
    """Returns (vmem_capacity_bytes, block_rows) for the local TPU generation."""
    vmem_cap = 128 * 1024 * 1024
    try:
        info = pltpu.get_tpu_info()
        vmem_cap = int(getattr(info, "vmem_capacity_bytes", vmem_cap))
    except Exception:
        pass
    # v7x has 64 MiB VMEM per TensorCore -> smaller row blocks; v5e/v6e: 128 MiB.
    block_rows = 256 if vmem_cap <= 64 * 1024 * 1024 else 512
    return vmem_cap, block_rows


def _make_mlp_kernel(num_layers):
    """Build a fused MLP kernel for a fixed (static) number of layers."""

    def kernel(*refs):
        x_ref = refs[0]
        o_ref = refs[-1]
        params = refs[1:-1]                      # w0, b0, w1, b1, ...
        h = x_ref[...].astype(jnp.float32)       # (TM, D0_pad) f32
        for i in range(num_layers):
            w = params[2 * i][...]               # (Di_pad, Di+1_pad) bf16
            b = params[2 * i + 1][...]           # (1, Di+1_pad) f32
            # bf16 MXU operands, f32 accumulation; bias/ReLU stay f32 (VPU).
            h = jnp.dot(h.astype(jnp.bfloat16), w,
                        preferred_element_type=jnp.float32) + b
            if i < num_layers - 1:
                h = jnp.maximum(h, 0.0)
        o_ref[...] = h.astype(o_ref.dtype)

    return kernel


def prepare_mlp_params(params):
    """Pad feature dims and cast weights to bf16 ONCE, outside the forward path.

    params: tuple of (weight (fan_in, fan_out), bias (fan_out,)) pairs,
            weights stored transposed relative to torch.nn.Linear.
    Returns (padded_arrays, dims, dims_p) where dims/dims_p are Python ints
    (static metadata for the jitted forward).
    """
    dims = tuple([params[0][0].shape[0]] + [w.shape[1] for (w, _) in params])
    # Layer-0 contraction dim only needs sublane alignment (8 for f32 x);
    # every layer's output (lane) dim is padded to 128 for lane-dense stores.
    dims_p = tuple([_round_up(dims[0], 8)] +
                   [_round_up(d, 128) for d in dims[1:]])

    padded = []
    for i, (w, b) in enumerate(params):
        wp = jnp.zeros((dims_p[i], dims_p[i + 1]), jnp.bfloat16)
        wp = wp.at[: w.shape[0], : w.shape[1]].set(w.astype(jnp.bfloat16))
        bp = jnp.zeros((1, dims_p[i + 1]), jnp.float32)
        bp = bp.at[0, : b.shape[0]].set(b.astype(jnp.float32))
        padded += [wp, bp]
    return tuple(padded), dims, dims_p


@functools.partial(
    jax.jit,
    static_argnames=("dims", "dims_p", "block_rows", "vmem_cap",
                     "single_buffer_weights"))
def _mlp_forward_padded(x, padded, *, dims, dims_p, block_rows, vmem_cap,
                        single_buffer_weights):
    num_layers = len(padded) // 2
    orig_shape = x.shape
    d_in, d_out = dims[0], dims[-1]

    x2d = x.reshape(-1, d_in).astype(jnp.float32)
    M = x2d.shape[0]
    m8 = _round_up(M, 8)

    # Row tiling: small problems run in a single step; larger problems get at
    # least 2 grid steps (256-aligned) so x/out DMAs pipeline against compute.
    if m8 <= 256:
        tm = m8
    else:
        tm = min(block_rows, _round_up((m8 + 1) // 2, 256))
    m_pad = _round_up(m8, tm)

    x_p = jnp.zeros((m_pad, dims_p[0]), jnp.float32).at[:M, :d_in].set(x2d)

    grid = (m_pad // tm,)

    # Constant index_map -> weights/biases stay resident in VMEM across grid
    # steps; single-buffer them so they count once against the VMEM budget.
    w_kwargs = {"pipeline_mode": pl.Buffered(1)} if single_buffer_weights else {}
    in_specs = [pl.BlockSpec((tm, dims_p[0]), lambda i: (i, 0))]
    for li in range(num_layers):
        in_specs.append(pl.BlockSpec((dims_p[li], dims_p[li + 1]),
                                     lambda i: (0, 0), **w_kwargs))
        in_specs.append(pl.BlockSpec((1, dims_p[li + 1]),
                                     lambda i: (0, 0), **w_kwargs))
    out_spec = pl.BlockSpec((tm, dims_p[-1]), lambda i: (i, 0))

    # Explicit VMEM budget: resident weights + double-buffered activation
    # tiles + f32 intermediate working set, with headroom, capped per chip.
    weight_bytes = sum(dims_p[li] * dims_p[li + 1] * 2 + dims_p[li + 1] * 4
                       for li in range(num_layers))
    io_bytes = 2 * tm * (dims_p[0] + dims_p[-1]) * 4
    interm_bytes = 2 * tm * max(dims_p) * 4
    needed = int(1.2 * (weight_bytes + io_bytes + interm_bytes)) + (2 << 20)
    cap = int(0.85 * vmem_cap)          # ~108 MiB on v5e/v6e, ~54 MiB on v7x
    vmem_limit = max(32 * 1024 * 1024, min(needed, cap))
    # TODO(synk): if total bf16 weights approach ~0.5*VMEM (v7x cliff), stream
    # the largest layer's weights from HBM (pl.ANY + pltpu.emit_pipeline)
    # instead of requiring full residency.

    flops = 2 * m_pad * sum(dims_p[li] * dims_p[li + 1]
                            for li in range(num_layers))
    bytes_accessed = (m_pad * dims_p[0] * 4 + weight_bytes
                      + m_pad * dims_p[-1] * 4)

    out_p = pl.pallas_call(
        _make_mlp_kernel(num_layers),
        out_shape=jax.ShapeDtypeStruct((m_pad, dims_p[-1]), jnp.float32),
        grid_spec=pltpu.PrefetchScalarGridSpec(
            num_scalar_prefetch=0,
            grid=grid,
            in_specs=in_specs,
            out_specs=out_spec,
        ),
        compiler_params=pltpu.CompilerParams(
            dimension_semantics=("parallel",),
            vmem_limit_bytes=vmem_limit,
        ),
        cost_estimate=pl.CostEstimate(
            flops=flops, transcendentals=0, bytes_accessed=bytes_accessed),
    )(x_p, *padded)

    out = out_p[:M, :d_out]
    return out.reshape(*orig_shape[:-1], d_out)


def mlp_forward(x, prepared):
    """Fused MLP forward. `prepared` comes from prepare_mlp_params(params)."""
    padded, dims, dims_p = prepared
    vmem_cap, block_rows = _tpu_config()
    try:
        return _mlp_forward_padded(x, padded, dims=dims, dims_p=dims_p,
                                   block_rows=block_rows, vmem_cap=vmem_cap,
                                   single_buffer_weights=True)
    except Exception:
        # Fallback if this JAX/Mosaic version rejects single-buffered specs.
        return _mlp_forward_padded(x, padded, dims=dims, dims_p=dims_p,
                                   block_rows=block_rows, vmem_cap=vmem_cap,
                                   single_buffer_weights=False)


def init_mlp_params(key, input_dim, hidden_dim, output_dim, num_layers):
    """Deterministic init matching nn.Linear defaults:
    uniform(-1/sqrt(fan_in), 1/sqrt(fan_in)) for weight and bias.
    Weights are stored as (fan_in, fan_out), i.e. transposed vs torch."""
    h = [hidden_dim] * (num_layers - 1)
    in_dims = [input_dim] + h
    out_dims = h + [output_dim]
    params = []
    for n, k in zip(in_dims, out_dims):
        key, kw, kb = jax.random.split(key, 3)
        bound = 1.0 / math.sqrt(n)
        w = jax.random.uniform(kw, (n, k), jnp.float32, minval=-bound, maxval=bound)
        b = jax.random.uniform(kb, (k,), jnp.float32, minval=-bound, maxval=bound)
        params.append((w, b))
    return tuple(params)


def mlp_reference(x, params):
    """Pure-JAX (f32) reference of MLP.forward."""
    h = x
    L = len(params)
    for i, (w, b) in enumerate(params):
        h = jnp.matmul(h, w) + b
        if i < L - 1:
            h = jnp.maximum(h, 0.0)
    return h


if __name__ == "__main__":
    key = jax.random.PRNGKey(0)
    k_x, k_p = jax.random.split(key)

    # Small shapes consistent with the module: (batch, seq, feature) input
    # through a 3-layer MLP.
    B, S = 4, 8
    input_dim, hidden_dim, output_dim, num_layers = 16, 32, 8, 3

    x = jax.random.normal(k_x, (B, S, input_dim), jnp.float32)
    params = init_mlp_params(k_p, input_dim, hidden_dim, output_dim, num_layers)

    prepared = prepare_mlp_params(params)   # pad + bf16-cast once, not per call
    out = mlp_forward(x, prepared)
    jax.block_until_ready(out)

    ref = mlp_reference(x, params)
    assert out.shape == (B, S, output_dim)
    # bf16 MXU operands with f32 accumulation -> loosened tolerance vs f32 ref.
    assert jnp.allclose(out, ref, atol=2e-2, rtol=2e-2), \
        float(jnp.max(jnp.abs(out - ref)))

    # Also exercise num_layers == 1 (single Linear, no ReLU) path.
    params1 = init_mlp_params(k_p, input_dim, hidden_dim, output_dim, 1)
    out1 = mlp_forward(x, prepare_mlp_params(params1))
    jax.block_until_ready(out1)
    assert jnp.allclose(out1, mlp_reference(x, params1), atol=2e-2, rtol=2e-2)

    print("KERNEL_OK")
</pallas_src>

<mosaic_0001>
module attributes {stable_mosaic.version = 11 : i64} {
  func.func @kernel(%arg0: i32, %arg1: memref<32x16xf32, #tpu.memory_space<vmem>>, %arg2: memref<16x128xbf16, #tpu.memory_space<vmem>>, %arg3: memref<1x128xf32, #tpu.memory_space<vmem>>, %arg4: memref<128x128xbf16, #tpu.memory_space<vmem>>, %arg5: memref<1x128xf32, #tpu.memory_space<vmem>>, %arg6: memref<128x128xbf16, #tpu.memory_space<vmem>>, %arg7: memref<1x128xf32, #tpu.memory_space<vmem>>, %arg8: memref<32x128xf32, #tpu.memory_space<vmem>>) attributes {dimension_semantics = [#tpu.dimension_semantics<parallel>], iteration_bounds = array<i64: 1>, scalar_prefetch = 0 : i64, scratch_operands = 0 : i64, tpu.core_type = #tpu.core_type<tc>, window_params = [{transform_indices = @transform_0, window_bounds = array<i64: 32, 16>}, {pipeline_mode = #tpu.pipeline_mode<synchronous>, transform_indices = @transform_1, window_bounds = array<i64: 16, 128>}, {pipeline_mode = #tpu.pipeline_mode<synchronous>, transform_indices = @transform_2, window_bounds = array<i64: 1, 128>}, {pipeline_mode = #tpu.pipeline_mode<synchronous>, transform_indices = @transform_3, window_bounds = array<i64: 128, 128>}, {pipeline_mode = #tpu.pipeline_mode<synchronous>, transform_indices = @transform_4, window_bounds = array<i64: 1, 128>}, {pipeline_mode = #tpu.pipeline_mode<synchronous>, transform_indices = @transform_5, window_bounds = array<i64: 128, 128>}, {pipeline_mode = #tpu.pipeline_mode<synchronous>, transform_indices = @transform_6, window_bounds = array<i64: 1, 128>}, {transform_indices = @transform_7, window_bounds = array<i64: 32, 128>}]} {
    %c0 = arith.constant 0 : index
    %c0_0 = arith.constant 0 : index
    %0 = vector.load %arg1[%c0, %c0_0] : memref<32x16xf32, #tpu.memory_space<vmem>>, vector<32x16xf32>
    %c0_1 = arith.constant 0 : index
    %c0_2 = arith.constant 0 : index
    %1 = vector.load %arg2[%c0_1, %c0_2] : memref<16x128xbf16, #tpu.memory_space<vmem>>, vector<16x128xbf16>
    %c0_3 = arith.constant 0 : index
    %c0_4 = arith.constant 0 : index
    %2 = vector.load %arg3[%c0_3, %c0_4] : memref<1x128xf32, #tpu.memory_space<vmem>>, vector<1x128xf32>
    %3 = arith.truncf %0 : vector<32x16xf32> to vector<32x16xbf16>
    %cst = arith.constant dense<0.000000e+00> : vector<32x128xf32>
    %4 = tpu.matmul %3, %1, %cst {dimension_numbers = #tpu.dot_dimension_numbers<[1], [0], [0], [1], [0, 0, 1, 1], [], []>} : vector<32x16xbf16>, vector<16x128xbf16>, vector<32x128xf32> -> vector<32x128xf32>
    %5 = vector.broadcast %2 : vector<1x128xf32> to vector<32x128xf32>
    %6 = arith.addf %4, %5 : vector<32x128xf32>
    %cst_5 = arith.constant 0.000000e+00 : f32
    %7 = vector.broadcast %cst_5 : f32 to vector<32x128xf32>
    %8 = arith.maximumf %6, %7 : vector<32x128xf32>
    %c0_6 = arith.constant 0 : index
    %c0_7 = arith.constant 0 : index
    %9 = vector.load %arg4[%c0_6, %c0_7] : memref<128x128xbf16, #tpu.memory_space<vmem>>, vector<128x128xbf16>
    %c0_8 = arith.constant 0 : index
    %c0_9 = arith.constant 0 : index
    %10 = vector.load %arg5[%c0_8, %c0_9] : memref<1x128xf32, #tpu.memory_space<vmem>>, vector<1x128xf32>
    %11 = arith.truncf %8 : vector<32x128xf32> to vector<32x128xbf16>
    %cst_10 = arith.constant dense<0.000000e+00> : vector<32x128xf32>
    %12 = tpu.matmul %11, %9, %cst_10 {dimension_numbers = #tpu.dot_dimension_numbers<[1], [0], [0], [1], [0, 0, 1, 1], [], []>} : vector<32x128xbf16>, vector<128x128xbf16>, vector<32x128xf32> -> vector<32x128xf32>
    %13 = vector.broadcast %10 : vector<1x128xf32> to vector<32x128xf32>
    %14 = arith.addf %12, %13 : vector<32x128xf32>
    %cst_11 = arith.constant 0.000000e+00 : f32
    %15 = vector.broadcast %cst_11 : f32 to vector<32x128xf32>
    %16 = arith.maximumf %14, %15 : vector<32x128xf32>
    %c0_12 = arith.constant 0 : index
    %c0_13 = arith.constant 0 : index
    %17 = vector.load %arg6[%c0_12, %c0_13] : memref<128x128xbf16, #tpu.memory_space<vmem>>, vector<128x128xbf16>
    %c0_14 = arith.constant 0 : index
    %c0_15 = arith.constant 0 : index
    %18 = vector.load %arg7[%c0_14, %c0_15] : memref<1x128xf32, #tpu.memory_space<vmem>>, vector<1x128xf32>
    %19 = arith.truncf %16 : vector<32x128xf32> to vector<32x128xbf16>
    %cst_16 = arith.constant dense<0.000000e+00> : vector<32x128xf32>
    %20 = tpu.matmul %19, %17, %cst_16 {dimension_numbers = #tpu.dot_dimension_numbers<[1], [0], [0], [1], [0, 0, 1, 1], [], []>} : vector<32x128xbf16>, vector<128x128xbf16>, vector<32x128xf32> -> vector<32x128xf32>
    %21 = vector.broadcast %18 : vector<1x128xf32> to vector<32x128xf32>
    %22 = arith.addf %20, %21 : vector<32x128xf32>
    %c0_17 = arith.constant 0 : index
    %c0_18 = arith.constant 0 : index
    %23 = vector.load %arg8[%c0_17, %c0_18] : memref<32x128xf32, #tpu.memory_space<vmem>>, vector<32x128xf32>
    tpu.vector_store %arg8[%c0_17, %c0_18], %22 {strides = array<i32>} : memref<32x128xf32, #tpu.memory_space<vmem>>, vector<32x128xf32>,
    return
  }
  func.func @transform_0(%arg0: i32) -> (i32, i32) {
    %c0_i32 = arith.constant 0 : i32
    %c0_i32_0 = arith.constant 0 : i32
    return %arg0, %c0_i32 : i32, i32
  }
  func.func @transform_1(%arg0: i32) -> (i32, i32) {
    %c0_i32 = arith.constant 0 : i32
    %c0_i32_0 = arith.constant 0 : i32
    %c0_i32_1 = arith.constant 0 : i32
    return %c0_i32, %c0_i32_0 : i32, i32
  }
  func.func @transform_2(%arg0: i32) -> (i32, i32) {
    %c0_i32 = arith.constant 0 : i32
    %c0_i32_0 = arith.constant 0 : i32
    %c0_i32_1 = arith.constant 0 : i32
    return %c0_i32, %c0_i32_0 : i32, i32
  }
  func.func @transform_3(%arg0: i32) -> (i32, i32) {
    %c0_i32 = arith.constant 0 : i32
    %c0_i32_0 = arith.constant 0 : i32
    %c0_i32_1 = arith.constant 0 : i32
    return %c0_i32, %c0_i32_0 : i32, i32
  }
  func.func @transform_4(%arg0: i32) -> (i32, i32) {
    %c0_i32 = arith.constant 0 : i32
    %c0_i32_0 = arith.constant 0 : i32
    %c0_i32_1 = arith.constant 0 : i32
    return %c0_i32, %c0_i32_0 : i32, i32
  }
  func.func @transform_5(%arg0: i32) -> (i32, i32) {
    %c0_i32 = arith.constant 0 : i32
    %c0_i32_0 = arith.constant 0 : i32
    %c0_i32_1 = arith.constant 0 : i32
    return %c0_i32, %c0_i32_0 : i32, i32
  }
  func.func @transform_6(%arg0: i32) -> (i32, i32) {
    %c0_i32 = arith.constant 0 : i32
    %c0_i32_0 = arith.constant 0 : i32
    %c0_i32_1 = arith.constant 0 : i32
    return %c0_i32, %c0_i32_0 : i32, i32
  }
  func.func @transform_7(%arg0: i32) -> (i32, i32) {
    %c0_i32 = arith.constant 0 : i32
    %c0_i32_0 = arith.constant 0 : i32
    return %arg0, %c0_i32 : i32, i32
  }
}

module attributes {stable_mosaic.version = 11 : i64} {
  func.func @kernel(%arg0: i32, %arg1: memref<32x16xf32, #tpu.memory_space<vmem>>, %arg2: memref<16x128xbf16, #tpu.memory_space<vmem>>, %arg3: memref<1x128xf32, #tpu.memory_space<vmem>>, %arg4: memref<128x128xbf16, #tpu.memory_space<vmem>>, %arg5: memref<1x128xf32, #tpu.memory_space<vmem>>, %arg6: memref<128x128xbf16, #tpu.memory_space<vmem>>, %arg7: memref<1x128xf32, #tpu.memory_space<vmem>>, %arg8: memref<32x128xf32, #tpu.memory_space<vmem>>) attributes {dimension_semantics = [#tpu.dimension_semantics<parallel>], iteration_bounds = array<i64: 1>, scalar_prefetch = 0 : i64, scratch_operands = 0 : i64, tpu.core_type = #tpu.core_type<tc>, window_params = [{transform_indices = @transform_0, window_bounds = array<i64: 32, 16>}, {pipeline_mode = #tpu.pipeline_mode<synchronous>, transform_indices = @transform_1, window_bounds = array<i64: 16, 128>}, {pipeline_mode = #tpu.pipeline_mode<synchronous>, transform_indices = @transform_2, window_bounds = array<i64: 1, 128>}, {pipeline_mode = #tpu.pipeline_mode<synchronous>, transform_indices = @transform_3, window_bounds = array<i64: 128, 128>}, {pipeline_mode = #tpu.pipeline_mode<synchronous>, transform_indices = @transform_4, window_bounds = array<i64: 1, 128>}, {pipeline_mode = #tpu.pipeline_mode<synchronous>, transform_indices = @transform_5, window_bounds = array<i64: 128, 128>}, {pipeline_mode = #tpu.pipeline_mode<synchronous>, transform_indices = @transform_6, window_bounds = array<i64: 1, 128>}, {transform_indices = @transform_7, window_bounds = array<i64: 32, 128>}]} {
    %c0 = arith.constant 0 : index
    %c0_0 = arith.constant 0 : index
    %0 = vector.load %arg1[%c0, %c0_0] : memref<32x16xf32, #tpu.memory_space<vmem>>, vector<32x16xf32>
    %c0_1 = arith.constant 0 : index
    %c0_2 = arith.constant 0 : index
    %1 = vector.load %arg2[%c0_1, %c0_2] : memref<16x128xbf16, #tpu.memory_space<vmem>>, vector<16x128xbf16>
    %c0_3 = arith.constant 0 : index
    %c0_4 = arith.constant 0 : index
    %2 = vector.load %arg3[%c0_3, %c0_4] : memref<1x128xf32, #tpu.memory_space<vmem>>, vector<1x128xf32>
    %3 = arith.truncf %0 : vector<32x16xf32> to vector<32x16xbf16>
    %cst = arith.constant dense<0.000000e+00> : vector<32x128xf32>
    %4 = tpu.matmul %3, %1, %cst {dimension_numbers = #tpu.dot_dimension_numbers<[1], [0], [0], [1], [0, 0, 1, 1], [], []>} : vector<32x16xbf16>, vector<16x128xbf16>, vector<32x128xf32> -> vector<32x128xf32>
    %5 = vector.broadcast %2 : vector<1x128xf32> to vector<32x128xf32>
    %6 = arith.addf %4, %5 : vector<32x128xf32>
    %cst_5 = arith.constant 0.000000e+00 : f32
    %7 = vector.broadcast %cst_5 : f32 to vector<32x128xf32>
    %8 = arith.maximumf %6, %7 : vector<32x128xf32>
    %c0_6 = arith.constant 0 : index
    %c0_7 = arith.constant 0 : index
    %9 = vector.load %arg4[%c0_6, %c0_7] : memref<128x128xbf16, #tpu.memory_space<vmem>>, vector<128x128xbf16>
    %c0_8 = arith.constant 0 : index
    %c0_9 = arith.constant 0 : index
    %10 = vector.load %arg5[%c0_8, %c0_9] : memref<1x128xf32, #tpu.memory_space<vmem>>, vector<1x128xf32>
    %11 = arith.truncf %8 : vector<32x128xf32> to vector<32x128xbf16>
    %cst_10 = arith.constant dense<0.000000e+00> : vector<32x128xf32>
    %12 = tpu.matmul %11, %9, %cst_10 {dimension_numbers = #tpu.dot_dimension_numbers<[1], [0], [0], [1], [0, 0, 1, 1], [], []>} : vector<32x128xbf16>, vector<128x128xbf16>, vector<32x128xf32> -> vector<32x128xf32>
    %13 = vector.broadcast %10 : vector<1x128xf32> to vector<32x128xf32>
    %14 = arith.addf %12, %13 : vector<32x128xf32>
    %cst_11 = arith.constant 0.000000e+00 : f32
    %15 = vector.broadcast %cst_11 : f32 to vector<32x128xf32>
    %16 = arith.maximumf %14, %15 : vector<32x128xf32>
    %c0_12 = arith.constant 0 : index
    %c0_13 = arith.constant 0 : index
    %17 = vector.load %arg6[%c0_12, %c0_13] : memref<128x128xbf16, #tpu.memory_space<vmem>>, vector<128x128xbf16>
    %c0_14 = arith.constant 0 : index
    %c0_15 = arith.constant 0 : index
    %18 = vector.load %arg7[%c0_14, %c0_15] : memref<1x128xf32, #tpu.memory_space<vmem>>, vector<1x128xf32>
    %19 = arith.truncf %16 : vector<32x128xf32> to vector<32x128xbf16>
    %cst_16 = arith.constant dense<0.000000e+00> : vector<32x128xf32>
    %20 = tpu.matmul %19, %17, %cst_16 {dimension_numbers = #tpu.dot_dimension_numbers<[1], [0], [0], [1], [0, 0, 1, 1], [], []>} : vector<32x128xbf16>, vector<128x128xbf16>, vector<32x128xf32> -> vector<32x128xf32>
    %21 = vector.broadcast %18 : vector<1x128xf32> to vector<32x128xf32>
    %22 = arith.addf %20, %21 : vector<32x128xf32>
    %c0_17 = arith.constant 0 : index
    %c0_18 = arith.constant 0 : index
    %23 = vector.load %arg8[%c0_17, %c0_18] : memref<32x128xf32, #tpu.memory_space<vmem>>, vector<32x128xf32>
    tpu.vector_store %arg8[%c0_17, %c0_18], %22 {strides = array<i32>} : memref<32x128xf32, #tpu.memory_space<vmem>>, vector<32x128xf32>,
    return
  }
  func.func @transform_0(%arg0: i32) -> (i32, i32) {
    %c0_i32 = arith.constant 0 : i32
    %c0_i32_0 = arith.constant 0 : i32
    return %arg0, %c0_i32 : i32, i32
  }
  func.func @transform_1(%arg0: i32) -> (i32, i32) {
    %c0_i32 = arith.constant 0 : i32
    %c0_i32_0 = arith.constant 0 : i32
    %c0_i32_1 = arith.constant 0 : i32
    return %c0_i32, %c0_i32_0 : i32, i32
  }
  func.func @transform_2(%arg0: i32) -> (i32, i32) {
    %c0_i32 = arith.constant 0 : i32
    %c0_i32_0 = arith.constant 0 : i32
    %c0_i32_1 = arith.constant 0 : i32
    return %c0_i32, %c0_i32_0 : i32, i32
  }
  func.func @transform_3(%arg0: i32) -> (i32, i32) {
    %c0_i32 = arith.constant 0 : i32
    %c0_i32_0 = arith.constant 0 : i32
    %c0_i32_1 = arith.constant 0 : i32
    return %c0_i32, %c0_i32_0 : i32, i32
  }
  func.func @transform_4(%arg0: i32) -> (i32, i32) {
    %c0_i32 = arith.constant 0 : i32
    %c0_i32_0 = arith.constant 0 : i32
    %c0_i32_1 = arith.constant 0 : i32
    return %c0_i32, %c0_i32_0 : i32, i32
  }
  func.func @transform_5(%arg0: i32) -> (i32, i32) {
    %c0_i32 = arith.constant 0 : i32
    %c0_i32_0 = arith.constant 0 : i32
    %c0_i32_1 = arith.constant 0 : i32
    return %c0_i32, %c0_i32_0 : i32, i32
  }
  func.func @transform_6(%arg0: i32) -> (i32, i32) {
    %c0_i32 = arith.constant 0 : i32
    %c0_i32_0 = arith.constant 0 : i32
    %c0_i32_1 = arith.constant 0 : i32
    return %c0_i32, %c0_i32_0 : i32, i32
  }
  func.func @transform_7(%arg0: i32) -> (i32, i32) {
    %c0_i32 = arith.constant 0 : i32
    %c0_i32_0 = arith.constant 0 : i32
    return %arg0, %c0_i32 : i32, i32
  }
}

</mosaic_0001>

<llo_original>
// kernel: _mlp_forward_padded.1
$region0: #{_mlp_forward_padded.1}
  #allocation0 [shape = 'u32[]', space=smem, size = 0x4, offset = 0x4, fixed_abs, tag = 'smem constant byte address 0x4 - core index']
  #allocation1 [shape = 'u32[144,128]{1,0:T(1,128)}', space=vmem, size = 0x12000, scoped, tag = 'internal scratch']
  %s0 = inlined_call_operand.hbm [shape: f32[32,16], index: 0, kind: input, shape index: {}]
  %s1 = inlined_call_operand.hbm [shape: bf16[16,128], index: 1, kind: input, shape index: {}]
  %s2 = inlined_call_operand.vmem [shape: f32[1,128], index: 2, kind: input, shape index: {}]
  %s3 = inlined_call_operand.hbm [shape: bf16[128,128], index: 3, kind: input, shape index: {}]
  %s4 = inlined_call_operand.vmem [shape: f32[1,128], index: 4, kind: input, shape index: {}]
  %s5 = inlined_call_operand.hbm [shape: bf16[128,128], index: 5, kind: input, shape index: {}]
  %s6 = inlined_call_operand.vmem [shape: f32[1,128], index: 6, kind: input, shape index: {}]
  %s7 = inlined_call_operand.vmem [shape: f32[32,128], index: 7, kind: output, shape index: {}]
  %s8 = sld [smem:[#allocation0]]
  $region54: #{_mlp_forward_padded.1} parent=0
    _
  %s10 = ssub.s32 1, %s8
  %s11 = scalar_select 0, %s10, %s8
  $region1: #{_mlp_forward_padded.1} parent=0
    #allocation2 [shape = 'u8[16384]{0}', space=vmem, size = 0x4000, scoped, tag = 'input window, operand 0, single buffered']
    #allocation3 [shape = 's32[1]{0}', space=sflag, size = 0x4, scoped, tag = 'scoped memory for _mlp_forward_padded.1']
    #allocation4 [shape = 'u8[4096]{0}', space=vmem, size = 0x1000, scoped, tag = 'input window, operand 1, single buffered']
    #allocation5 [shape = 's32[1]{0}', space=sflag, size = 0x4, scoped, tag = 'scoped memory for _mlp_forward_padded.1']
    #allocation6 [shape = 'u8[32768]{0}', space=vmem, size = 0x8000, scoped, tag = 'input window, operand 3, single buffered']
    #allocation7 [shape = 'u8[32768]{0}', space=vmem, size = 0x8000, scoped, tag = 'input window, operand 5, single buffered']
    #allocation8 [shape = 's32[1]{0}', space=sflag, size = 0x4, scoped, tag = 'scoped memory for _mlp_forward_padded.1']
    %12 = vsyncpa [#allocation3], 0
    %13 = vsyncpa [#allocation5], 0
    %14 = vsyncpa [#allocation8], 0
    // Predicated region
    $region2: #{_mlp_forward_padded.1} parent=1 // pred_check
      _
    $region3: #{_mlp_forward_padded.1} parent=1 // pred_check_branch
      %16 = sbr.rel (0) target = $region5
    $region4: #{_mlp_forward_padded.1} parent=1 // pred_region
      %s18 = ssub.s32 512, 512
      %19 = vsyncadd [#allocation3], %s18
      %s20 = sshll.u32 [#allocation2], 4
      %s21 = int_to_ptr.vmem [resolvable:$true] %s20
      %26 = dma.hbm_to_vmem [thread:$0]  %s0, 512, %s21, [#allocation3], 128, 128, 8
    $region5: #{_mlp_forward_padded.1} parent=1 // pred_fallthru
      _
    // Predicated region
    $region6: #{_mlp_forward_padded.1} parent=1 // pred_check
      _
    $region7: #{_mlp_forward_padded.1} parent=1 // pred_check_branch
      %28 = sbr.rel (0) target = $region9
    $region8: #{_mlp_forward_padded.1} parent=1 // pred_region
      %s30 = ssub.s32 128, 128
      %31 = vsyncadd [#allocation5], %s30
      %s32 = sshll.u32 [#allocation4], 4
      %s33 = int_to_ptr.vmem [resolvable:$true] %s32
      %38 = dma.hbm_to_vmem [thread:$0]  %s1, 128, %s33, [#allocation5], 64, 64, 4
    $region9: #{_mlp_forward_padded.1} parent=1 // pred_fallthru
      _
    // Predicated region
    $region10: #{_mlp_forward_padded.1} parent=1 // pred_check
      _
    $region11: #{_mlp_forward_padded.1} parent=1 // pred_check_branch
      %40 = sbr.rel (0) target = $region13
    $region12: #{_mlp_forward_padded.1} parent=1 // pred_region
      _
    $region13: #{_mlp_forward_padded.1} parent=1 // pred_fallthru
      _
    // Predicated region
    $region14: #{_mlp_forward_padded.1} parent=1 // pred_check
      _
    $region15: #{_mlp_forward_padded.1} parent=1 // pred_check_branch
      %42 = sbr.rel (0) target = $region17
    $region16: #{_mlp_forward_padded.1} parent=1 // pred_region
      %s44 = ssub.s32 1024, 1024
      %45 = vsyncadd [#allocation5], %s44
      %s46 = sshll.u32 [#allocation6], 4
      %s47 = int_to_ptr.vmem [resolvable:$true] %s46
      %52 = dma.hbm_to_vmem [thread:$0]  %s3, 1024, %s47, [#allocation5], 64, 64, 4
    $region17: #{_mlp_forward_padded.1} parent=1 // pred_fallthru
      _
    // Predicated region
    $region18: #{_mlp_forward_padded.1} parent=1 // pred_check
      _
    $region19: #{_mlp_forward_padded.1} parent=1 // pred_check_branch
      %54 = sbr.rel (0) target = $region21
    $region20: #{_mlp_forward_padded.1} parent=1 // pred_region
      _
    $region21: #{_mlp_forward_padded.1} parent=1 // pred_fallthru
      _
    // Predicated region
    $region22: #{_mlp_forward_padded.1} parent=1 // pred_check
      _
    $region23: #{_mlp_forward_padded.1} parent=1 // pred_check_branch
      %56 = sbr.rel (0) target = $region25
    $region24: #{_mlp_forward_padded.1} parent=1 // pred_region
      %s58 = ssub.s32 1024, 1024
      %59 = vsyncadd [#allocation8], %s58
      %s60 = sshll.u32 [#allocation7], 4
      %s61 = int_to_ptr.vmem [resolvable:$true] %s60
      %66 = dma.hbm_to_vmem [thread:$0]  %s5, 1024, %s61, [#allocation8], 64, 64, 4
    $region25: #{_mlp_forward_padded.1} parent=1 // pred_fallthru
      _
    // Predicated region
    $region26: #{_mlp_forward_padded.1} parent=1 // pred_check
      _
    $region27: #{_mlp_forward_padded.1} parent=1 // pred_check_branch
      %68 = sbr.rel (0) target = $region29
    $region28: #{_mlp_forward_padded.1} parent=1 // pred_region
      _
    $region29: #{_mlp_forward_padded.1} parent=1 // pred_fallthru
      _
    // Predicated region
    $region30: #{_mlp_forward_padded.1} parent=1 // pred_check
      _
    $region31: #{_mlp_forward_padded.1} parent=1 // pred_check_branch
      %70 = sbr.rel (0) target = $region33
    $region32: #{_mlp_forward_padded.1} parent=1 // pred_region
      %71 = dma.done [#allocation3], 512
    $region33: #{_mlp_forward_padded.1} parent=1 // pred_fallthru
      _
    // Predicated region
    $region34: #{_mlp_forward_padded.1} parent=1 // pred_check
      _
    $region35: #{_mlp_forward_padded.1} parent=1 // pred_check_branch
      %73 = sbr.rel (0) target = $region37
    $region36: #{_mlp_forward_padded.1} parent=1 // pred_region
      %74 = dma.done [#allocation5], 128
    $region37: #{_mlp_forward_padded.1} parent=1 // pred_fallthru
      _
    // Predicated region
    $region38: #{_mlp_forward_padded.1} parent=1 // pred_check
      _
    $region39: #{_mlp_forward_padded.1} parent=1 // pred_check_branch
      %76 = sbr.rel (0) target = $region41
    $region40: #{_mlp_forward_padded.1} parent=1 // pred_region
      %77 = dma.done [#allocation5], 1024
    $region41: #{_mlp_forward_padded.1} parent=1 // pred_fallthru
      _
    // Predicated region
    $region42: #{_mlp_forward_padded.1} parent=1 // pred_check
      _
    $region43: #{_mlp_forward_padded.1} parent=1 // pred_check_branch
      %79 = sbr.rel (0) target = $region45
    $region44: #{_mlp_forward_padded.1} parent=1 // pred_region
      %80 = dma.done [#allocation8], 1024
    $region45: #{_mlp_forward_padded.1} parent=1 // pred_fallthru
      _
    %v82 = vld [vmem:[#allocation2] sm:$0xff]
    %v83 = vld [vmem:[#allocation2 + $0x8] sm:$0xff]
    %v84 = vld [vmem:[#allocation2 + $0x10] sm:$0xff]
    %v85 = vld [vmem:[#allocation2 + $0x18] sm:$0xff]
    %v86 = vld [vmem:[#allocation4] sm:$0xf]
    %v87 = vld [vmem:[#allocation4 + $0x4] sm:$0xf]
    %v88 = vld [vmem:[%s2] sm:$0x1]
    %v89 = vpack.c.bf16 %v83, %v82
    %v90 = vpack.c.bf16 %v85, %v84
    %v92 = vlaneseq
    %v93 = vshrl.u32 %v92, 7
    %v94 = vsub.s32 0, %v93
    %v95 = vrot.slane %v88, %v94
    %v99 = vunpack.c.l.b16 %v86
    %v100 = vunpack.c.l.b16 %v87
    %v101 = vpack.c.b16 %v100, %v99
    %vm103 = vcmask 130048
    %v105 = vsel %vm103, %v89, 0
    %v108 = vsel %vm103, %v90, 0
    %110 = vmatprep.subr.bf16.mxu0 0
    %111 = vmatpush1.bf16.msra.mxu0 0
    %112 = vmatprep.subr.bf16.mxu0 0
    %113 = vmatpush1.bf16.msra.mxu0 0
    %114 = vmatprep.subr.bf16.mxu0 0
    %115 = vmatpush1.bf16.msra.mxu0 0
    %116 = vmatprep.subr.bf16.mxu0 0
    %117 = vmatpush1.bf16.msra.mxu0 0
    %118 = vmatprep.subr.bf16.mxu0 0
    %119 = vmatpush1.bf16.msra.mxu0 0
    %120 = vmatprep.subr.bf16.mxu0 0
    %121 = vmatpush1.bf16.msra.mxu0 0
    %122 = vmatprep.subr.bf16.mxu0 0
    %123 = vmatpush1.bf16.msra.mxu0 0
    %124 = vmatprep.subr.bf16.mxu0 0
    %125 = vmatpush1.bf16.msra.mxu0 %v101
    %126 = vmatprep.subr.bf16.mxu0 0
    %127 = vmatpush2.bf16.msra.mxu0 0
    %128 = vmatprep.subr.bf16.mxu0 0
    %129 = vmatpush2.bf16.msra.mxu0 0
    %130 = vmatprep.subr.bf16.mxu0 0
    %131 = vmatpush2.bf16.msra.mxu0 0
    %132 = vmatprep.subr.bf16.mxu0 0
    %133 = vmatpush2.bf16.msra.mxu0 0
    %134 = vmatprep.subr.bf16.mxu0 0
    %135 = vmatpush2.bf16.msra.mxu0 0
    %136 = vmatprep.subr.bf16.mxu0 0
    %137 = vmatpush2.bf16.msra.mxu0 0
    %138 = vmatprep.subr.bf16.mxu0 0
    %139 = vmatpush2.bf16.msra.mxu0 0
    %140 = vmatprep.subr.bf16.mxu0 0
    %141 = vmatpush2.bf16.msra.mxu0 0
    %142 = vmatprep.mubr.bf16.mxu0 0
    %143 = vmatmul.mubr.bf16.gmra.mxu0 %v105
    %v144 = vpop.f32.mrf.mxu0
    %v145 = vadd.f32 %v95, %v144
    %v146 = vpop.f32.mrf.mxu0
    %v147 = vpop.f32.mrf.mxu0
    %v148 = vadd.f32 %v95, %v147
    %v149 = vpop.f32.mrf.mxu0
    %150 = vmatprep.mubr.bf16.mxu0 0
    %151 = vmatmul.mubr.bf16.gmra.mxu0 %v108
    %v152 = vpop.f32.mrf.mxu0
    %v153 = vadd.f32 %v95, %v152
    %v154 = vpop.f32.mrf.mxu0
    %v155 = vpop.f32.mrf.mxu0
    %v156 = vadd.f32 %v95, %v155
    %v157 = vpop.f32.mrf.mxu0
    %158 = vdwg.mxu0
    %v159 = vmax.f32 %v145, 0.0
    %v160 = vmax.f32 %v148, 0.0
    %v161 = vmax.f32 %v153, 0.0
    %v162 = vmax.f32 %v156, 0.0
    %v163 = vld [vmem:[#allocation6] sm:$0xf]
    %v164 = vld [vmem:[#allocation6 + $0x4] sm:$0xf]
    %v165 = vld [vmem:[#allocation6 + $0x8] sm:$0xf]
    %v166 = vld [vmem:[#allocation6 + $0xc] sm:$0xf]
    %v167 = vld [vmem:[#allocation6 + $0x10] sm:$0xf]
    %v168 = vld [vmem:[#allocation6 + $0x14] sm:$0xf]
    %v169 = vld [vmem:[#allocation6 + $0x18] sm:$0xf]
    %v170 = vld [vmem:[#allocation6 + $0x1c] sm:$0xf]
    %v171 = vld [vmem:[#allocation6 + $0x20] sm:$0xf]
    %v172 = vld [vmem:[#allocation6 + $0x24] sm:$0xf]
    %v173 = vld [vmem:[#allocation6 + $0x28] sm:$0xf]
    %v174 = vld [vmem:[#allocation6 + $0x2c] sm:$0xf]
    %v175 = vld [vmem:[#allocation6 + $0x30] sm:$0xf]
    %v176 = vld [vmem:[#allocation6 + $0x34] sm:$0xf]
    %v177 = vld [vmem:[#allocation6 + $0x38] sm:$0xf]
    %v178 = vld [vmem:[#allocation6 + $0x3c] sm:$0xf]
    %v179 = vld [vmem:[%s4] sm:$0x1]
    %v180 = vpack.c.bf16 %v160, %v159
    %v181 = vpack.c.bf16 %v162, %v161
    %v183 = vlaneseq
    %v184 = vshrl.u32 %v183, 7
    %v185 = vsub.s32 0, %v184
    %v186 = vrot.slane %v179, %v185
    %v204 = vunpack.c.l.b16 %v163
    %v205 = vunpack.c.l.b16 %v164
    %v206 = vunpack.c.l.b16 %v165
    %v207 = vunpack.c.l.b16 %v166
    %v208 = vunpack.c.l.b16 %v167
    %v209 = vunpack.c.l.b16 %v168
    %v210 = vunpack.c.l.b16 %v169
    %v211 = vunpack.c.l.b16 %v170
    %v212 = vunpack.c.l.b16 %v171
    %v213 = vunpack.c.l.b16 %v172
    %v214 = vunpack.c.l.b16 %v173
    %v215 = vunpack.c.l.b16 %v174
    %v216 = vunpack.c.l.b16 %v175
    %v217 = vunpack.c.l.b16 %v176
    %v218 = vunpack.c.l.b16 %v177
    %v219 = vunpack.c.l.b16 %v178
    %v220 = vpack.c.b16 %v205, %v204
    %v221 = vpack.c.b16 %v207, %v206
    %v222 = vpack.c.b16 %v209, %v208
    %v223 = vpack.c.b16 %v211, %v210
    %v224 = vpack.c.b16 %v213, %v212
    %v225 = vpack.c.b16 %v215, %v214
    %v226 = vpack.c.b16 %v217, %v216
    %v227 = vpack.c.b16 %v219, %v218
    %236 = vmatprep.subr.bf16.mxu0 0
    %237 = vmatpush1.bf16.msra.mxu0 %v227
    %238 = vmatprep.subr.bf16.mxu0 0
    %239 = vmatpush1.bf16.msra.mxu0 %v226
    %240 = vmatprep.subr.bf16.mxu0 0
    %241 = vmatpush1.bf16.msra.mxu0 %v225
    %242 = vmatprep.subr.bf16.mxu0 0
    %243 = vmatpush1.bf16.msra.mxu0 %v224
    %244 = vmatprep.subr.bf16.mxu0 0
    %245 = vmatpush1.bf16.msra.mxu0 %v223
    %246 = vmatprep.subr.bf16.mxu0 0
    %247 = vmatpush1.bf16.msra.mxu0 %v222
    %248 = vmatprep.subr.bf16.mxu0 0
    %249 = vmatpush1.bf16.msra.mxu0 %v221
    %250 = vmatprep.subr.bf16.mxu0 0
    %251 = vmatpush1.bf16.msra.mxu0 %v220
    %252 = vmatprep.subr.bf16.mxu0 0
    %253 = vmatpush2.bf16.msra.mxu0 0
    %254 = vmatprep.subr.bf16.mxu0 0
    %255 = vmatpush2.bf16.msra.mxu0 0
    %256 = vmatprep.subr.bf16.mxu0 0
    %257 = vmatpush2.bf16.msra.mxu0 0
    %258 = vmatprep.subr.bf16.mxu0 0
    %259 = vmatpush2.bf16.msra.mxu0 0
    %260 = vmatprep.subr.bf16.mxu0 0
    %261 = vmatpush2.bf16.msra.mxu0 0
    %262 = vmatprep.subr.bf16.mxu0 0
    %263 = vmatpush2.bf16.msra.mxu0 0
    %264 = vmatprep.subr.bf16.mxu0 0
    %265 = vmatpush2.bf16.msra.mxu0 0
    %266 = vmatprep.subr.bf16.mxu0 0
    %267 = vmatpush2.bf16.msra.mxu0 0
    %268 = vmatprep.mubr.bf16.mxu0 0
    %269 = vmatmul.mubr.bf16.gmra.mxu0 %v180
    %v270 = vpop.f32.mrf.mxu0
    %v271 = vadd.f32 %v186, %v270
    %v272 = vpop.f32.mrf.mxu0
    %v273 = vpop.f32.mrf.mxu0
    %v274 = vadd.f32 %v186, %v273
    %v275 = vpop.f32.mrf.mxu0
    %276 = vmatprep.mubr.bf16.mxu0 0
    %277 = vmatmul.mubr.bf16.gmra.mxu0 %v181
    %v278 = vpop.f32.mrf.mxu0
    %v279 = vadd.f32 %v186, %v278
    %v280 = vpop.f32.mrf.mxu0
    %v281 = vpop.f32.mrf.mxu0
    %v282 = vadd.f32 %v186, %v281
    %v283 = vpop.f32.mrf.mxu0
    %284 = vdwg.mxu0
    %v285 = vmax.f32 %v271, 0.0
    %v286 = vmax.f32 %v274, 0.0
    %v287 = vmax.f32 %v279, 0.0
    %v288 = vmax.f32 %v282, 0.0
    %v289 = vld [vmem:[#allocation7] sm:$0xf]
    %v290 = vld [vmem:[#allocation7 + $0x4] sm:$0xf]
    %v291 = vld [vmem:[#allocation7 + $0x8] sm:$0xf]
    %v292 = vld [vmem:[#allocation7 + $0xc] sm:$0xf]
    %v293 = vld [vmem:[#allocation7 + $0x10] sm:$0xf]
    %v294 = vld [vmem:[#allocation7 + $0x14] sm:$0xf]
    %v295 = vld [vmem:[#allocation7 + $0x18] sm:$0xf]
    %v296 = vld [vmem:[#allocation7 + $0x1c] sm:$0xf]
    %v297 = vld [vmem:[#allocation7 + $0x20] sm:$0xf]
    %v298 = vld [vmem:[#allocation7 + $0x24] sm:$0xf]
    %v299 = vld [vmem:[#allocation7 + $0x28] sm:$0xf]
    %v300 = vld [vmem:[#allocation7 + $0x2c] sm:$0xf]
    %v301 = vld [vmem:[#allocation7 + $0x30] sm:$0xf]
    %v302 = vld [vmem:[#allocation7 + $0x34] sm:$0xf]
    %v303 = vld [vmem:[#allocation7 + $0x38] sm:$0xf]
    %v304 = vld [vmem:[#allocation7 + $0x3c] sm:$0xf]
    %v305 = vld [vmem:[%s6] sm:$0x1]
    %v306 = vpack.c.bf16 %v286, %v285
    %v307 = vpack.c.bf16 %v288, %v287
    %v309 = vlaneseq
    %v310 = vshrl.u32 %v309, 7
    %v311 = vsub.s32 0, %v310
    %v312 = vrot.slane %v305, %v311
    %v330 = vunpack.c.l.b16 %v289
    %v331 = vunpack.c.l.b16 %v290
    %v332 = vunpack.c.l.b16 %v291
    %v333 = vunpack.c.l.b16 %v292
    %v334 = vunpack.c.l.b16 %v293
    %v335 = vunpack.c.l.b16 %v294
    %v336 = vunpack.c.l.b16 %v295
    %v337 = vunpack.c.l.b16 %v296
    %v338 = vunpack.c.l.b16 %v297
    %v339 = vunpack.c.l.b16 %v298
    %v340 = vunpack.c.l.b16 %v299
    %v341 = vunpack.c.l.b16 %v300
    %v342 = vunpack.c.l.b16 %v301
    %v343 = vunpack.c.l.b16 %v302
    %v344 = vunpack.c.l.b16 %v303
    %v345 = vunpack.c.l.b16 %v304
    %v346 = vpack.c.b16 %v331, %v330
    %v347 = vpack.c.b16 %v333, %v332
    %v348 = vpack.c.b16 %v335, %v334
    %v349 = vpack.c.b16 %v337, %v336
    %v350 = vpack.c.b16 %v339, %v338
    %v351 = vpack.c.b16 %v341, %v340
    %v352 = vpack.c.b16 %v343, %v342
    %v353 = vpack.c.b16 %v345, %v344
    %362 = vmatprep.subr.bf16.mxu0 0
    %363 = vmatpush1.bf16.msra.mxu0 %v353
    %364 = vmatprep.subr.bf16.mxu0 0
    %365 = vmatpush1.bf16.msra.mxu0 %v352
    %366 = vmatprep.subr.bf16.mxu0 0
    %367 = vmatpush1.bf16.msra.mxu0 %v351
    %368 = vmatprep.subr.bf16.mxu0 0
    %369 = vmatpush1.bf16.msra.mxu0 %v350
    %370 = vmatprep.subr.bf16.mxu0 0
    %371 = vmatpush1.bf16.msra.mxu0 %v349
    %372 = vmatprep.subr.bf16.mxu0 0
    %373 = vmatpush1.bf16.msra.mxu0 %v348
    %374 = vmatprep.subr.bf16.mxu0 0
    %375 = vmatpush1.bf16.msra.mxu0 %v347
    %376 = vmatprep.subr.bf16.mxu0 0
    %377 = vmatpush1.bf16.msra.mxu0 %v346
    %378 = vmatprep.subr.bf16.mxu0 0
    %379 = vmatpush2.bf16.msra.mxu0 0
    %380 = vmatprep.subr.bf16.mxu0 0
    %381 = vmatpush2.bf16.msra.mxu0 0
    %382 = vmatprep.subr.bf16.mxu0 0
    %383 = vmatpush2.bf16.msra.mxu0 0
    %384 = vmatprep.subr.bf16.mxu0 0
    %385 = vmatpush2.bf16.msra.mxu0 0
    %386 = vmatprep.subr.bf16.mxu0 0
    %387 = vmatpush2.bf16.msra.mxu0 0
    %388 = vmatprep.subr.bf16.mxu0 0
    %389 = vmatpush2.bf16.msra.mxu0 0
    %390 = vmatprep.subr.bf16.mxu0 0
    %391 = vmatpush2.bf16.msra.mxu0 0
    %392 = vmatprep.subr.bf16.mxu0 0
    %393 = vmatpush2.bf16.msra.mxu0 0
    %394 = vmatprep.mubr.bf16.mxu0 0
    %395 = vmatmul.mubr.bf16.gmra.mxu0 %v306
    %v396 = vpop.f32.mrf.mxu0
    %v397 = vadd.f32 %v312, %v396
    %v398 = vpop.f32.mrf.mxu0
    %v399 = vpop.f32.mrf.mxu0
    %v400 = vadd.f32 %v312, %v399
    %v401 = vpop.f32.mrf.mxu0
    %402 = vmatprep.mubr.bf16.mxu0 0
    %403 = vmatmul.mubr.bf16.gmra.mxu0 %v307
    %v404 = vpop.f32.mrf.mxu0
    %v405 = vadd.f32 %v312, %v404
    %v406 = vpop.f32.mrf.mxu0
    %v407 = vpop.f32.mrf.mxu0
    %v408 = vadd.f32 %v312, %v407
    %v409 = vpop.f32.mrf.mxu0
    %410 = vdwg.mxu0
    %411 = vst [vmem:[%s7] sm:$0xff] %v397
    %412 = vst [vmem:[%s7 + $0x8] sm:$0xff] %v400
    %413 = vst [vmem:[%s7 + $0x10] sm:$0xff] %v405
    %414 = vst [vmem:[%s7 + $0x18] sm:$0xff] %v408
    // Predicated region
    $region46: #{_mlp_forward_padded.1} parent=1 // pred_check
      _
    $region47: #{_mlp_forward_padded.1} parent=1 // pred_check_branch
      %416 = sbr.rel (0) target = $region49
    $region48: #{_mlp_forward_padded.1} parent=1 // pred_region
      _
    $region49: #{_mlp_forward_padded.1} parent=1 // pred_fallthru
      _
    // Predicated region
    $region50: #{_mlp_forward_padded.1} parent=1 // pred_check
      _
    $region51: #{_mlp_forward_padded.1} parent=1 // pred_check_branch
      %418 = sbr.rel (0) target = $region53
    $region52: #{_mlp_forward_padded.1} parent=1 // pred_region
      _
    $region53: #{_mlp_forward_padded.1} parent=1 // pred_fallthru
      _
    %419 = vsyncpa [#allocation3], 1
    %420 = vsyncpa [#allocation5], 1
    %421 = vsyncpa [#allocation8], 1

// kernel: _mlp_forward_padded.1
$region0: #{_mlp_forward_padded.1}
  #allocation0 [shape = 'u32[]', space=smem, size = 0x4, offset = 0x4, fixed_abs, tag = 'smem constant byte address 0x4 - core index']
  #allocation1 [shape = 'u32[144,128]{1,0:T(1,128)}', space=vmem, size = 0x12000, scoped, tag = 'internal scratch']
  %s0 = inlined_call_operand.hbm [shape: f32[32,16], index: 0, kind: input, shape index: {}]
  %s1 = inlined_call_operand.hbm [shape: bf16[16,128], index: 1, kind: input, shape index: {}]
  %s2 = inlined_call_operand.vmem [shape: f32[1,128], index: 2, kind: input, shape index: {}]
  %s3 = inlined_call_operand.hbm [shape: bf16[128,128], index: 3, kind: input, shape index: {}]
  %s4 = inlined_call_operand.vmem [shape: f32[1,128], index: 4, kind: input, shape index: {}]
  %s5 = inlined_call_operand.hbm [shape: bf16[128,128], index: 5, kind: input, shape index: {}]
  %s6 = inlined_call_operand.vmem [shape: f32[1,128], index: 6, kind: input, shape index: {}]
  %s7 = inlined_call_operand.vmem [shape: f32[32,128], index: 7, kind: output, shape index: {}]
  %s8 = sld [smem:[#allocation0]]
  $region54: #{_mlp_forward_padded.1} parent=0
    _
  %s10 = ssub.s32 1, %s8
  %s11 = scalar_select 0, %s10, %s8
  $region1: #{_mlp_forward_padded.1} parent=0
    #allocation2 [shape = 'u8[16384]{0}', space=vmem, size = 0x4000, scoped, tag = 'input window, operand 0, single buffered']
    #allocation3 [shape = 's32[1]{0}', space=sflag, size = 0x4, scoped, tag = 'scoped memory for _mlp_forward_padded.1']
    #allocation4 [shape = 'u8[4096]{0}', space=vmem, size = 0x1000, scoped, tag = 'input window, operand 1, single buffered']
    #allocation5 [shape = 's32[1]{0}', space=sflag, size = 0x4, scoped, tag = 'scoped memory for _mlp_forward_padded.1']
    #allocation6 [shape = 'u8[32768]{0}', space=vmem, size = 0x8000, scoped, tag = 'input window, operand 3, single buffered']
    #allocation7 [shape = 'u8[32768]{0}', space=vmem, size = 0x8000, scoped, tag = 'input window, operand 5, single buffered']
    #allocation8 [shape = 's32[1]{0}', space=sflag, size = 0x4, scoped, tag = 'scoped memory for _mlp_forward_padded.1']
    %12 = vsyncpa [#allocation3], 0
    %13 = vsyncpa [#allocation5], 0
    %14 = vsyncpa [#allocation8], 0
    // Predicated region
    $region2: #{_mlp_forward_padded.1} parent=1 // pred_check
      _
    $region3: #{_mlp_forward_padded.1} parent=1 // pred_check_branch
      %16 = sbr.rel (0) target = $region5
    $region4: #{_mlp_forward_padded.1} parent=1 // pred_region
      %s18 = ssub.s32 512, 512
      %19 = vsyncadd [#allocation3], %s18
      %s20 = sshll.u32 [#allocation2], 4
      %s21 = int_to_ptr.vmem [resolvable:$true] %s20
      %26 = dma.hbm_to_vmem [thread:$0]  %s0, 512, %s21, [#allocation3], 128, 128, 8
    $region5: #{_mlp_forward_padded.1} parent=1 // pred_fallthru
      _
    // Predicated region
    $region6: #{_mlp_forward_padded.1} parent=1 // pred_check
      _
    $region7: #{_mlp_forward_padded.1} parent=1 // pred_check_branch
      %28 = sbr.rel (0) target = $region9
    $region8: #{_mlp_forward_padded.1} parent=1 // pred_region
      %s30 = ssub.s32 128, 128
      %31 = vsyncadd [#allocation5], %s30
      %s32 = sshll.u32 [#allocation4], 4
      %s33 = int_to_ptr.vmem [resolvable:$true] %s32
      %38 = dma.hbm_to_vmem [thread:$0]  %s1, 128, %s33, [#allocation5], 64, 64, 4
    $region9: #{_mlp_forward_padded.1} parent=1 // pred_fallthru
      _
    // Predicated region
    $region10: #{_mlp_forward_padded.1} parent=1 // pred_check
      _
    $region11: #{_mlp_forward_padded.1} parent=1 // pred_check_branch
      %40 = sbr.rel (0) target = $region13
    $region12: #{_mlp_forward_padded.1} parent=1 // pred_region
      _
    $region13: #{_mlp_forward_padded.1} parent=1 // pred_fallthru
      _
    // Predicated region
    $region14: #{_mlp_forward_padded.1} parent=1 // pred_check
      _
    $region15: #{_mlp_forward_padded.1} parent=1 // pred_check_branch
      %42 = sbr.rel (0) target = $region17
    $region16: #{_mlp_forward_padded.1} parent=1 // pred_region
      %s44 = ssub.s32 1024, 1024
      %45 = vsyncadd [#allocation5], %s44
      %s46 = sshll.u32 [#allocation6], 4
      %s47 = int_to_ptr.vmem [resolvable:$true] %s46
      %52 = dma.hbm_to_vmem [thread:$0]  %s3, 1024, %s47, [#allocation5], 64, 64, 4
    $region17: #{_mlp_forward_padded.1} parent=1 // pred_fallthru
      _
    // Predicated region
    $region18: #{_mlp_forward_padded.1} parent=1 // pred_check
      _
    $region19: #{_mlp_forward_padded.1} parent=1 // pred_check_branch
      %54 = sbr.rel (0) target = $region21
    $region20: #{_mlp_forward_padded.1} parent=1 // pred_region
      _
    $region21: #{_mlp_forward_padded.1} parent=1 // pred_fallthru
      _
    // Predicated region
    $region22: #{_mlp_forward_padded.1} parent=1 // pred_check
      _
    $region23: #{_mlp_forward_padded.1} parent=1 // pred_check_branch
      %56 = sbr.rel (0) target = $region25
    $region24: #{_mlp_forward_padded.1} parent=1 // pred_region
      %s58 = ssub.s32 1024, 1024
      %59 = vsyncadd [#allocation8], %s58
      %s60 = sshll.u32 [#allocation7], 4
      %s61 = int_to_ptr.vmem [resolvable:$true] %s60
      %66 = dma.hbm_to_vmem [thread:$0]  %s5, 1024, %s61, [#allocation8], 64, 64, 4
    $region25: #{_mlp_forward_padded.1} parent=1 // pred_fallthru
      _
    // Predicated region
    $region26: #{_mlp_forward_padded.1} parent=1 // pred_check
      _
    $region27: #{_mlp_forward_padded.1} parent=1 // pred_check_branch
      %68 = sbr.rel (0) target = $region29
    $region28: #{_mlp_forward_padded.1} parent=1 // pred_region
      _
    $region29: #{_mlp_forward_padded.1} parent=1 // pred_fallthru
      _
    // Predicated region
    $region30: #{_mlp_forward_padded.1} parent=1 // pred_check
      _
    $region31: #{_mlp_forward_padded.1} parent=1 // pred_check_branch
      %70 = sbr.rel (0) target = $region33
    $region32: #{_mlp_forward_padded.1} parent=1 // pred_region
      %71 = dma.done [#allocation3], 512
    $region33: #{_mlp_forward_padded.1} parent=1 // pred_fallthru
      _
    // Predicated region
    $region34: #{_mlp_forward_padded.1} parent=1 // pred_check
      _
    $region35: #{_mlp_forward_padded.1} parent=1 // pred_check_branch
      %73 = sbr.rel (0) target = $region37
    $region36: #{_mlp_forward_padded.1} parent=1 // pred_region
      %74 = dma.done [#allocation5], 128
    $region37: #{_mlp_forward_padded.1} parent=1 // pred_fallthru
      _
    // Predicated region
    $region38: #{_mlp_forward_padded.1} parent=1 // pred_check
      _
    $region39: #{_mlp_forward_padded.1} parent=1 // pred_check_branch
      %76 = sbr.rel (0) target = $region41
    $region40: #{_mlp_forward_padded.1} parent=1 // pred_region
      %77 = dma.done [#allocation5], 1024
    $region41: #{_mlp_forward_padded.1} parent=1 // pred_fallthru
      _
    // Predicated region
    $region42: #{_mlp_forward_padded.1} parent=1 // pred_check
      _
    $region43: #{_mlp_forward_padded.1} parent=1 // pred_check_branch
      %79 = sbr.rel (0) target = $region45
    $region44: #{_mlp_forward_padded.1} parent=1 // pred_region
      %80 = dma.done [#allocation8], 1024
    $region45: #{_mlp_forward_padded.1} parent=1 // pred_fallthru
      _
    %v82 = vld [vmem:[#allocation2] sm:$0xff]
    %v83 = vld [vmem:[#allocation2 + $0x8] sm:$0xff]
    %v84 = vld [vmem:[#allocation2 + $0x10] sm:$0xff]
    %v85 = vld [vmem:[#allocation2 + $0x18] sm:$0xff]
    %v86 = vld [vmem:[#allocation4] sm:$0xf]
    %v87 = vld [vmem:[#allocation4 + $0x4] sm:$0xf]
    %v88 = vld [vmem:[%s2] sm:$0x1]
    %v89 = vpack.c.bf16 %v83, %v82
    %v90 = vpack.c.bf16 %v85, %v84
    %v92 = vlaneseq
    %v93 = vshrl.u32 %v92, 7
    %v94 = vsub.s32 0, %v93
    %v95 = vrot.slane %v88, %v94
    %v99 = vunpack.c.l.b16 %v86
    %v100 = vunpack.c.l.b16 %v87
    %v101 = vpack.c.b16 %v100, %v99
    %vm103 = vcmask 130048
    %v105 = vsel %vm103, %v89, 0
    %v108 = vsel %vm103, %v90, 0
    %110 = vmatprep.subr.bf16.mxu0 0
    %111 = vmatpush1.bf16.msra.mxu0 0
    %112 = vmatprep.subr.bf16.mxu0 0
    %113 = vmatpush1.bf16.msra.mxu0 0
    %114 = vmatprep.subr.bf16.mxu0 0
    %115 = vmatpush1.bf16.msra.mxu0 0
    %116 = vmatprep.subr.bf16.mxu0 0
    %117 = vmatpush1.bf16.msra.mxu0 0
    %118 = vmatprep.subr.bf16.mxu0 0
    %119 = vmatpush1.bf16.msra.mxu0 0
    %120 = vmatprep.subr.bf16.mxu0 0
    %121 = vmatpush1.bf16.msra.mxu0 0
    %122 = vmatprep.subr.bf16.mxu0 0
    %123 = vmatpush1.bf16.msra.mxu0 0
    %124 = vmatprep.subr.bf16.mxu0 0
    %125 = vmatpush1.bf16.msra.mxu0 %v101
    %126 = vmatprep.subr.bf16.mxu0 0
    %127 = vmatpush2.bf16.msra.mxu0 0
    %128 = vmatprep.subr.bf16.mxu0 0
    %129 = vmatpush2.bf16.msra.mxu0 0
    %130 = vmatprep.subr.bf16.mxu0 0
    %131 = vmatpush2.bf16.msra.mxu0 0
    %132 = vmatprep.subr.bf16.mxu0 0
    %133 = vmatpush2.bf16.msra.mxu0 0
    %134 = vmatprep.subr.bf16.mxu0 0
    %135 = vmatpush2.bf16.msra.mxu0 0
    %136 = vmatprep.subr.bf16.mxu0 0
    %137 = vmatpush2.bf16.msra.mxu0 0
    %138 = vmatprep.subr.bf16.mxu0 0
    %139 = vmatpush2.bf16.msra.mxu0 0
    %140 = vmatprep.subr.bf16.mxu0 0
    %141 = vmatpush2.bf16.msra.mxu0 0
    %142 = vmatprep.mubr.bf16.mxu0 0
    %143 = vmatmul.mubr.bf16.gmra.mxu0 %v105
    %v144 = vpop.f32.mrf.mxu0
    %v145 = vadd.f32 %v95, %v144
    %v146 = vpop.f32.mrf.mxu0
    %v147 = vpop.f32.mrf.mxu0
    %v148 = vadd.f32 %v95, %v147
    %v149 = vpop.f32.mrf.mxu0
    %150 = vmatprep.mubr.bf16.mxu0 0
    %151 = vmatmul.mubr.bf16.gmra.mxu0 %v108
    %v152 = vpop.f32.mrf.mxu0
    %v153 = vadd.f32 %v95, %v152
    %v154 = vpop.f32.mrf.mxu0
    %v155 = vpop.f32.mrf.mxu0
    %v156 = vadd.f32 %v95, %v155
    %v157 = vpop.f32.mrf.mxu0
    %158 = vdwg.mxu0
    %v159 = vmax.f32 %v145, 0.0
    %v160 = vmax.f32 %v148, 0.0
    %v161 = vmax.f32 %v153, 0.0
    %v162 = vmax.f32 %v156, 0.0
    %v163 = vld [vmem:[#allocation6] sm:$0xf]
    %v164 = vld [vmem:[#allocation6 + $0x4] sm:$0xf]
    %v165 = vld [vmem:[#allocation6 + $0x8] sm:$0xf]
    %v166 = vld [vmem:[#allocation6 + $0xc] sm:$0xf]
    %v167 = vld [vmem:[#allocation6 + $0x10] sm:$0xf]
    %v168 = vld [vmem:[#allocation6 + $0x14] sm:$0xf]
    %v169 = vld [vmem:[#allocation6 + $0x18] sm:$0xf]
    %v170 = vld [vmem:[#allocation6 + $0x1c] sm:$0xf]
    %v171 = vld [vmem:[#allocation6 + $0x20] sm:$0xf]
    %v172 = vld [vmem:[#allocation6 + $0x24] sm:$0xf]
    %v173 = vld [vmem:[#allocation6 + $0x28] sm:$0xf]
    %v174 = vld [vmem:[#allocation6 + $0x2c] sm:$0xf]
    %v175 = vld [vmem:[#allocation6 + $0x30] sm:$0xf]
    %v176 = vld [vmem:[#allocation6 + $0x34] sm:$0xf]
    %v177 = vld [vmem:[#allocation6 + $0x38] sm:$0xf]
    %v178 = vld [vmem:[#allocation6 + $0x3c] sm:$0xf]
    %v179 = vld [vmem:[%s4] sm:$0x1]
    %v180 = vpack.c.bf16 %v160, %v159
    %v181 = vpack.c.bf16 %v162, %v161
    %v183 = vlaneseq
    %v184 = vshrl.u32 %v183, 7
    %v185 = vsub.s32 0, %v184
    %v186 = vrot.slane %v179, %v185
    %v204 = vunpack.c.l.b16 %v163
    %v205 = vunpack.c.l.b16 %v164
    %v206 = vunpack.c.l.b16 %v165
    %v207 = vunpack.c.l.b16 %v166
    %v208 = vunpack.c.l.b16 %v167
    %v209 = vunpack.c.l.b16 %v168
    %v210 = vunpack.c.l.b16 %v169
    %v211 = vunpack.c.l.b16 %v170
    %v212 = vunpack.c.l.b16 %v171
    %v213 = vunpack.c.l.b16 %v172
    %v214 = vunpack.c.l.b16 %v173
    %v215 = vunpack.c.l.b16 %v174
    %v216 = vunpack.c.l.b16 %v175
    %v217 = vunpack.c.l.b16 %v176
    %v218 = vunpack.c.l.b16 %v177
    %v219 = vunpack.c.l.b16 %v178
    %v220 = vpack.c.b16 %v205, %v204
    %v221 = vpack.c.b16 %v207, %v206
    %v222 = vpack.c.b16 %v209, %v208
    %v223 = vpack.c.b16 %v211, %v210
    %v224 = vpack.c.b16 %v213, %v212
    %v225 = vpack.c.b16 %v215, %v214
    %v226 = vpack.c.b16 %v217, %v216
    %v227 = vpack.c.b16 %v219, %v218
    %236 = vmatprep.subr.bf16.mxu0 0
    %237 = vmatpush1.bf16.msra.mxu0 %v227
    %238 = vmatprep.subr.bf16.mxu0 0
    %239 = vmatpush1.bf16.msra.mxu0 %v226
    %240 = vmatprep.subr.bf16.mxu0 0
    %241 = vmatpush1.bf16.msra.mxu0 %v225
    %242 = vmatprep.subr.bf16.mxu0 0
    %243 = vmatpush1.bf16.msra.mxu0 %v224
    %244 = vmatprep.subr.bf16.mxu0 0
    %245 = vmatpush1.bf16.msra.mxu0 %v223
    %246 = vmatprep.subr.bf16.mxu0 0
    %247 = vmatpush1.bf16.msra.mxu0 %v222
    %248 = vmatprep.subr.bf16.mxu0 0
    %249 = vmatpush1.bf16.msra.mxu0 %v221
    %250 = vmatprep.subr.bf16.mxu0 0
    %251 = vmatpush1.bf16.msra.mxu0 %v220
    %252 = vmatprep.subr.bf16.mxu0 0
    %253 = vmatpush2.bf16.msra.mxu0 0
    %254 = vmatprep.subr.bf16.mxu0 0
    %255 = vmatpush2.bf16.msra.mxu0 0
    %256 = vmatprep.subr.bf16.mxu0 0
    %257 = vmatpush2.bf16.msra.mxu0 0
    %258 = vmatprep.subr.bf16.mxu0 0
    %259 = vmatpush2.bf16.msra.mxu0 0
    %260 = vmatprep.subr.bf16.mxu0 0
    %261 = vmatpush2.bf16.msra.mxu0 0
    %262 = vmatprep.subr.bf16.mxu0 0
    %263 = vmatpush2.bf16.msra.mxu0 0
    %264 = vmatprep.subr.bf16.mxu0 0
    %265 = vmatpush2.bf16.msra.mxu0 0
    %266 = vmatprep.subr.bf16.mxu0 0
    %267 = vmatpush2.bf16.msra.mxu0 0
    %268 = vmatprep.mubr.bf16.mxu0 0
    %269 = vmatmul.mubr.bf16.gmra.mxu0 %v180
    %v270 = vpop.f32.mrf.mxu0
    %v271 = vadd.f32 %v186, %v270
    %v272 = vpop.f32.mrf.mxu0
    %v273 = vpop.f32.mrf.mxu0
    %v274 = vadd.f32 %v186, %v273
    %v275 = vpop.f32.mrf.mxu0
    %276 = vmatprep.mubr.bf16.mxu0 0
    %277 = vmatmul.mubr.bf16.gmra.mxu0 %v181
    %v278 = vpop.f32.mrf.mxu0
    %v279 = vadd.f32 %v186, %v278
    %v280 = vpop.f32.mrf.mxu0
    %v281 = vpop.f32.mrf.mxu0
    %v282 = vadd.f32 %v186, %v281
    %v283 = vpop.f32.mrf.mxu0
    %284 = vdwg.mxu0
    %v285 = vmax.f32 %v271, 0.0
    %v286 = vmax.f32 %v274, 0.0
    %v287 = vmax.f32 %v279, 0.0
    %v288 = vmax.f32 %v282, 0.0
    %v289 = vld [vmem:[#allocation7] sm:$0xf]
    %v290 = vld [vmem:[#allocation7 + $0x4] sm:$0xf]
    %v291 = vld [vmem:[#allocation7 + $0x8] sm:$0xf]
    %v292 = vld [vmem:[#allocation7 + $0xc] sm:$0xf]
    %v293 = vld [vmem:[#allocation7 + $0x10] sm:$0xf]
    %v294 = vld [vmem:[#allocation7 + $0x14] sm:$0xf]
    %v295 = vld [vmem:[#allocation7 + $0x18] sm:$0xf]
    %v296 = vld [vmem:[#allocation7 + $0x1c] sm:$0xf]
    %v297 = vld [vmem:[#allocation7 + $0x20] sm:$0xf]
    %v298 = vld [vmem:[#allocation7 + $0x24] sm:$0xf]
    %v299 = vld [vmem:[#allocation7 + $0x28] sm:$0xf]
    %v300 = vld [vmem:[#allocation7 + $0x2c] sm:$0xf]
    %v301 = vld [vmem:[#allocation7 + $0x30] sm:$0xf]
    %v302 = vld [vmem:[#allocation7 + $0x34] sm:$0xf]
    %v303 = vld [vmem:[#allocation7 + $0x38] sm:$0xf]
    %v304 = vld [vmem:[#allocation7 + $0x3c] sm:$0xf]
    %v305 = vld [vmem:[%s6] sm:$0x1]
    %v306 = vpack.c.bf16 %v286, %v285
    %v307 = vpack.c.bf16 %v288, %v287
    %v309 = vlaneseq
    %v310 = vshrl.u32 %v309, 7
    %v311 = vsub.s32 0, %v310
    %v312 = vrot.slane %v305, %v311
    %v330 = vunpack.c.l.b16 %v289
    %v331 = vunpack.c.l.b16 %v290
    %v332 = vunpack.c.l.b16 %v291
    %v333 = vunpack.c.l.b16 %v292
    %v334 = vunpack.c.l.b16 %v293
    %v335 = vunpack.c.l.b16 %v294
    %v336 = vunpack.c.l.b16 %v295
    %v337 = vunpack.c.l.b16 %v296
    %v338 = vunpack.c.l.b16 %v297
    %v339 = vunpack.c.l.b16 %v298
    %v340 = vunpack.c.l.b16 %v299
    %v341 = vunpack.c.l.b16 %v300
    %v342 = vunpack.c.l.b16 %v301
    %v343 = vunpack.c.l.b16 %v302
    %v344 = vunpack.c.l.b16 %v303
    %v345 = vunpack.c.l.b16 %v304
    %v346 = vpack.c.b16 %v331, %v330
    %v347 = vpack.c.b16 %v333, %v332
    %v348 = vpack.c.b16 %v335, %v334
    %v349 = vpack.c.b16 %v337, %v336
    %v350 = vpack.c.b16 %v339, %v338
    %v351 = vpack.c.b16 %v341, %v340
    %v352 = vpack.c.b16 %v343, %v342
    %v353 = vpack.c.b16 %v345, %v344
    %362 = vmatprep.subr.bf16.mxu0 0
    %363 = vmatpush1.bf16.msra.mxu0 %v353
    %364 = vmatprep.subr.bf16.mxu0 0
    %365 = vmatpush1.bf16.msra.mxu0 %v352
    %366 = vmatprep.subr.bf16.mxu0 0
    %367 = vmatpush1.bf16.msra.mxu0 %v351
    %368 = vmatprep.subr.bf16.mxu0 0
    %369 = vmatpush1.bf16.msra.mxu0 %v350
    %370 = vmatprep.subr.bf16.mxu0 0
    %371 = vmatpush1.bf16.msra.mxu0 %v349
    %372 = vmatprep.subr.bf16.mxu0 0
    %373 = vmatpush1.bf16.msra.mxu0 %v348
    %374 = vmatprep.subr.bf16.mxu0 0
    %375 = vmatpush1.bf16.msra.mxu0 %v347
    %376 = vmatprep.subr.bf16.mxu0 0
    %377 = vmatpush1.bf16.msra.mxu0 %v346
    %378 = vmatprep.subr.bf16.mxu0 0
    %379 = vmatpush2.bf16.msra.mxu0 0
    %380 = vmatprep.subr.bf16.mxu0 0
    %381 = vmatpush2.bf16.msra.mxu0 0
    %382 = vmatprep.subr.bf16.mxu0 0
    %383 = vmatpush2.bf16.msra.mxu0 0
    %384 = vmatprep.subr.bf16.mxu0 0
    %385 = vmatpush2.bf16.msra.mxu0 0
    %386 = vmatprep.subr.bf16.mxu0 0
    %387 = vmatpush2.bf16.msra.mxu0 0
    %388 = vmatprep.subr.bf16.mxu0 0
    %389 = vmatpush2.bf16.msra.mxu0 0
    %390 = vmatprep.subr.bf16.mxu0 0
    %391 = vmatpush2.bf16.msra.mxu0 0
    %392 = vmatprep.subr.bf16.mxu0 0
    %393 = vmatpush2.bf16.msra.mxu0 0
    %394 = vmatprep.mubr.bf16.mxu0 0
    %395 = vmatmul.mubr.bf16.gmra.mxu0 %v306
    %v396 = vpop.f32.mrf.mxu0
    %v397 = vadd.f32 %v312, %v396
    %v398 = vpop.f32.mrf.mxu0
    %v399 = vpop.f32.mrf.mxu0
    %v400 = vadd.f32 %v312, %v399
    %v401 = vpop.f32.mrf.mxu0
    %402 = vmatprep.mubr.bf16.mxu0 0
    %403 = vmatmul.mubr.bf16.gmra.mxu0 %v307
    %v404 = vpop.f32.mrf.mxu0
    %v405 = vadd.f32 %v312, %v404
    %v406 = vpop.f32.mrf.mxu0
    %v407 = vpop.f32.mrf.mxu0
    %v408 = vadd.f32 %v312, %v407
    %v409 = vpop.f32.mrf.mxu0
    %410 = vdwg.mxu0
    %411 = vst [vmem:[%s7] sm:$0xff] %v397
    %412 = vst [vmem:[%s7 + $0x8] sm:$0xff] %v400
    %413 = vst [vmem:[%s7 + $0x10] sm:$0xff] %v405
    %414 = vst [vmem:[%s7 + $0x18] sm:$0xff] %v408
    // Predicated region
    $region46: #{_mlp_forward_padded.1} parent=1 // pred_check
      _
    $region47: #{_mlp_forward_padded.1} parent=1 // pred_check_branch
      %416 = sbr.rel (0) target = $region49
    $region48: #{_mlp_forward_padded.1} parent=1 // pred_region
      _
    $region49: #{_mlp_forward_padded.1} parent=1 // pred_fallthru
      _
    // Predicated region
    $region50: #{_mlp_forward_padded.1} parent=1 // pred_check
      _
    $region51: #{_mlp_forward_padded.1} parent=1 // pred_check_branch
      %418 = sbr.rel (0) target = $region53
    $region52: #{_mlp_forward_padded.1} parent=1 // pred_region
      _
    $region53: #{_mlp_forward_padded.1} parent=1 // pred_fallthru
      _
    %419 = vsyncpa [#allocation3], 1
    %420 = vsyncpa [#allocation5], 1
    %421 = vsyncpa [#allocation8], 1

</llo_original>
